<compile_context>
chip_gen: v7x
topology: tpu7x:2x2x1
jax: 0.10.0
libtpu: 0.0.40
codegen_flags: <defaults>
</compile_context>

<pallas_src>
import functools

import jax
import jax.numpy as jnp
import numpy as np
from jax import lax
from jax.experimental import pallas as pl
from jax.experimental.pallas import tpu as pltpu


# ------------------------- kernel 1: source-side work -------------------------

def _src_side_kernel(x_ref, ew1_ref, eb1_ref, ew2_ref, eb2_ref,
                     dw1_ref, db1_ref, dw2_ref, db2_ref,
                     emb_src_ref, w_cat_ref,
                     tr_ref, hat_ref, h1_ref, *, mm_dtype):
    """Encoder -> transformed; decoder -> feature_hat; batched per-head h1."""
    f32 = jnp.float32

    def mm(a, b):
        return jnp.dot(a.astype(mm_dtype), b.astype(mm_dtype),
                       preferred_element_type=f32)

    # encoder: fc2(relu(fc(feature_src)))
    h = jnp.maximum(mm(x_ref[...], ew1_ref[...]) + eb1_ref[...], 0.0)
    transformed = mm(h, ew2_ref[...]) + eb2_ref[...]
    tr_ref[...] = transformed.astype(tr_ref.dtype)

    # decoder: fcdecoder2(relu(fcdecoder(transformed)))
    d = jnp.maximum(mm(transformed, dw1_ref[...]) + db1_ref[...], 0.0)
    hat_ref[...] = (mm(d, dw2_ref[...]) + db2_ref[...]).astype(hat_ref.dtype)

    # all heads' h1 = emb_src @ W_h, batched along columns (MXU lane fill)
    h1_ref[...] = mm(emb_src_ref[...], w_cat_ref[...]).astype(h1_ref.dtype)


# --------------------- kernel 2: attention over dest tiles --------------------

def _attention_kernel(bias_ref, emb_dest_ref, h1_ref, tr_ref, ww2_cat_ref,
                      re_ref, *, num_heads, hidden, mm_dtype):
    f32 = jnp.float32
    tile_nd = emb_dest_ref.shape[0]

    def mm(a, b):
        return jnp.dot(a.astype(mm_dtype), b.astype(mm_dtype),
                       preferred_element_type=f32)

    # all heads' h2 @ W2 == emb_dest @ (W @ W2), batched along columns
    h2w_all = mm(emb_dest_ref[...], ww2_cat_ref[...])        # (tile, nh*H) f32
    h1_all = h1_ref[...]                                      # (Ns,  nh*H) f32
    keep = bias_ref[...] > 0                                  # (tile, Ns) bool
    neg_inf = jnp.float32(-9e15)

    atts = []
    for hd in range(num_heads):                               # static unroll
        cols = slice(hd * hidden, (hd + 1) * hidden)
        # e = h2w @ h1.T  (contract the last dims -> no explicit transpose)
        e = lax.dot_general(h2w_all[:, cols].astype(mm_dtype),
                            h1_all[:, cols].astype(mm_dtype),
                            (((1,), (1,)), ((), ())),
                            preferred_element_type=f32)        # (tile, Ns)
        e = jnp.where(e > 0, e, 0.2 * e)                       # LeakyReLU(0.2)
        e = jnp.where(keep, e, neg_inf)                        # replacement mask
        e = jnp.exp(e - jnp.max(e, axis=1, keepdims=True))
        att = e / jnp.sum(e, axis=1, keepdims=True)            # exact divide
        atts.append(att.astype(mm_dtype))

    # row-stack heads -> one matmul keeps `transformed` as the MXU RHS
    att_all = jnp.concatenate(atts, axis=0)                    # (nh*tile, Ns)
    hp_all = mm(att_all, tr_ref[...])                          # (nh*tile, T) f32
    # ELU (alpha=1); min() keeps exp from overflowing on the dead branch
    hp_all = jnp.where(hp_all > 0, hp_all,
                       jnp.exp(jnp.minimum(hp_all, 0.0)) - 1.0)

    acc = hp_all[0:tile_nd]
    for hd in range(1, num_heads):
        acc = acc + hp_all[hd * tile_nd:(hd + 1) * tile_nd]
    re_ref[...] = (acc * (1.0 / num_heads)).astype(re_ref.dtype)


# ------------------------------ wrapper ---------------------------------------

def prepare_attention_weights(params):
    """Fold W2 into W (associativity) and concatenate heads along columns."""
    W = params["att_W"]                        # (nh, E, H)
    W2 = params["att_W2"]                      # (nh, H, H)
    nh, E, H = W.shape
    WW2 = jnp.einsum("hek,hko->heo", W, W2)    # (nh, E, H)
    w_cat = jnp.transpose(W, (1, 0, 2)).reshape(E, nh * H)
    ww2_cat = jnp.transpose(WW2, (1, 0, 2)).reshape(E, nh * H)
    return w_cat, ww2_cat


def fairac2_forward(params, bias, emb_dest, emb_src, feature_src, *,
                    tile_nd=32, mm_dtype=jnp.bfloat16):
    nd, ns = bias.shape
    feat_dim = feature_src.shape[1]
    tfd = params["enc_w2"].shape[1]
    nh, emb_dim, hidden = params["att_W"].shape
    assert nd % tile_nd == 0, "demo assumes nd divisible by tile_nd"

    w_cat, ww2_cat = prepare_attention_weights(params)
    cast = lambda a: a.astype(mm_dtype)
    f32 = lambda a: a.astype(jnp.float32)

    vmem = pl.BlockSpec(memory_space=pltpu.MemorySpace.VMEM)
    # Explicit VMEM budget: safe on v5e (16 MiB scoped default), v6e (32 MiB)
    # and v7x (64 MiB physical); at these demo shapes actual usage is < 1 MiB.
    vmem_limit = 32 * 1024 * 1024

    # ---- call 1: src-side (encoder + decoder + batched h1), computed ONCE ----
    src_inputs = (
        cast(feature_src),
        cast(params["enc_w1"]), f32(params["enc_b1"]).reshape(1, -1),
        cast(params["enc_w2"]), f32(params["enc_b2"]).reshape(1, -1),
        cast(params["dec_w1"]), f32(params["dec_b1"]).reshape(1, -1),
        cast(params["dec_w2"]), f32(params["dec_b2"]).reshape(1, -1),
        cast(emb_src), cast(w_cat),
    )
    transformed, feature_hat, h1_all = pl.pallas_call(
        functools.partial(_src_side_kernel, mm_dtype=mm_dtype),
        out_shape=(jax.ShapeDtypeStruct((ns, tfd), jnp.float32),
                   jax.ShapeDtypeStruct((ns, feat_dim), jnp.float32),
                   jax.ShapeDtypeStruct((ns, nh * hidden), jnp.float32)),
        in_specs=[vmem] * len(src_inputs),
        out_specs=(vmem, vmem, vmem),
        compiler_params=pltpu.CompilerParams(vmem_limit_bytes=vmem_limit),
    )(*src_inputs)

    # ---- call 2: attention, gridded over destination-row tiles ----
    bias_i8 = (bias > 0).astype(jnp.int8)       # 4x less HBM traffic than f32
    grid = (nd // tile_nd,)
    feature_src_re = pl.pallas_call(
        functools.partial(_attention_kernel, num_heads=nh, hidden=hidden,
                          mm_dtype=mm_dtype),
        grid=grid,
        out_shape=jax.ShapeDtypeStruct((nd, tfd), jnp.float32),
        in_specs=[
            pl.BlockSpec((tile_nd, ns), lambda i: (i, 0)),           # bias tile
            pl.BlockSpec((tile_nd, emb_dim), lambda i: (i, 0)),      # emb_dest tile
            pl.BlockSpec((ns, nh * hidden), lambda i: (0, 0)),       # h1 (resident)
            pl.BlockSpec((ns, tfd), lambda i: (0, 0)),               # transformed (resident)
            pl.BlockSpec((emb_dim, nh * hidden), lambda i: (0, 0)),  # WW2 (resident)
        ],
        out_specs=pl.BlockSpec((tile_nd, tfd), lambda i: (i, 0)),
        compiler_params=pltpu.CompilerParams(
            dimension_semantics=("parallel",),
            vmem_limit_bytes=vmem_limit),
    )(bias_i8, cast(emb_dest), h1_all, transformed, cast(ww2_cat))

    return feature_src_re, feature_hat, transformed


# ----------------------------- parameter init ---------------------------------

def xavier_normal(key, shape, gain):
    fan_in, fan_out = shape[-2], shape[-1]
    std = gain * np.sqrt(2.0 / (fan_in + fan_out))
    return std * jax.random.normal(key, shape, dtype=jnp.float32)


def uniform_bias(key, fan_in, out_dim):
    bound = 1.0 / np.sqrt(fan_in)
    return jax.random.uniform(key, (out_dim,), jnp.float32, -bound, bound)


def init_params(key, feature_dim, tfd, emb_dim, hidden, num_heads):
    ks = jax.random.split(key, 12)
    p = {}
    # encoder: fc (feature_dim -> 2*tfd), fc2 (2*tfd -> tfd); stored as (in, out)
    p["enc_w1"] = xavier_normal(ks[0], (feature_dim, 2 * tfd), 1.414)
    p["enc_b1"] = uniform_bias(ks[1], feature_dim, 2 * tfd)
    p["enc_w2"] = xavier_normal(ks[2], (2 * tfd, tfd), 1.414)
    p["enc_b2"] = uniform_bias(ks[3], 2 * tfd, tfd)
    # decoder: fcdecoder (tfd -> 2*tfd), fcdecoder2 (2*tfd -> feature_dim)
    p["dec_w1"] = xavier_normal(ks[4], (tfd, 2 * tfd), 1.414)
    p["dec_b1"] = uniform_bias(ks[5], tfd, 2 * tfd)
    p["dec_w2"] = xavier_normal(ks[6], (2 * tfd, feature_dim), 1.414)
    p["dec_b2"] = uniform_bias(ks[7], 2 * tfd, feature_dim)
    # HGNN_AC attention heads: W (emb_dim, hidden), W2 (hidden, hidden) per head
    p["att_W"] = xavier_normal(ks[8], (num_heads, emb_dim, hidden), np.sqrt(2.0))
    p["att_W2"] = xavier_normal(ks[9], (num_heads, hidden, hidden), np.sqrt(2.0))
    return p


# ----------------------------- pure-JAX reference -----------------------------

def fairac2_reference(params, bias, emb_dest, emb_src, feature_src, *,
                      mm_dtype=jnp.bfloat16):
    """Pure-JAX reference mirroring the kernel's mixed-precision scheme
    (bf16 matmul operands, f32 accumulation / softmax / ELU), so it validates
    the Pallas plumbing (tiling, masking, softmax, head batching, W2 fold)."""
    f32 = jnp.float32
    c = lambda a: a.astype(mm_dtype)
    mm = lambda a, b: jnp.dot(c(a), c(b), preferred_element_type=f32)

    h = jnp.maximum(mm(feature_src, params["enc_w1"]) + params["enc_b1"], 0.0)
    transformed = mm(h, params["enc_w2"]) + params["enc_b2"]
    d = jnp.maximum(mm(transformed, params["dec_w1"]) + params["dec_b1"], 0.0)
    feature_hat = mm(d, params["dec_w2"]) + params["dec_b2"]

    w_cat, ww2_cat = prepare_attention_weights(params)
    nh, _, H = params["att_W"].shape
    h1_all = mm(emb_src, w_cat)
    h2w_all = mm(emb_dest, ww2_cat)
    heads = []
    for hd in range(nh):
        cols = slice(hd * H, (hd + 1) * H)
        e = lax.dot_general(c(h2w_all[:, cols]), c(h1_all[:, cols]),
                            (((1,), (1,)), ((), ())),
                            preferred_element_type=f32)
        e = jnp.where(e > 0, e, 0.2 * e)
        e = jnp.where(bias > 0, e, jnp.float32(-9e15))
        e = jnp.exp(e - jnp.max(e, axis=1, keepdims=True))
        att = e / jnp.sum(e, axis=1, keepdims=True)
        hp = mm(att, transformed)
        heads.append(jnp.where(hp > 0, hp, jnp.exp(jnp.minimum(hp, 0.0)) - 1.0))
    feature_src_re = sum(heads) * (1.0 / nh)
    return feature_src_re, feature_hat, transformed


# ----------------------------- main --------------------------------------------

if __name__ == "__main__":
    feature_dim = 32          # raw feature dim
    tfd = 16                  # transformed_feature_dim
    emb_dim = 32              # structural embedding dim
    hidden = 16               # args.attn_vec_dim
    num_heads = 2             # args.num_heads
    n_dest, n_src = 128, 48   # destination / source node counts
    tile_nd = 32              # destination rows per grid step (int8-friendly)

    key = jax.random.PRNGKey(0)
    kp, kb, kd, ks, kf = jax.random.split(key, 5)

    params = init_params(kp, feature_dim, tfd, emb_dim, hidden, num_heads)

    bias = (jax.random.uniform(kb, (n_dest, n_src)) > 0.4).astype(jnp.float32)
    emb_dest = jax.random.normal(kd, (n_dest, emb_dim), dtype=jnp.float32)
    emb_src = jax.random.normal(ks, (n_src, emb_dim), dtype=jnp.float32)
    feature_src = jax.random.normal(kf, (n_src, feature_dim), dtype=jnp.float32)

    feat_re, feat_hat, transformed = jax.block_until_ready(
        fairac2_forward(params, bias, emb_dest, emb_src, feature_src,
                        tile_nd=tile_nd, mm_dtype=jnp.bfloat16))

    ref_re, ref_hat, ref_tr = fairac2_reference(
        params, bias, emb_dest, emb_src, feature_src, mm_dtype=jnp.bfloat16)

    np.testing.assert_allclose(np.asarray(transformed), np.asarray(ref_tr),
                               rtol=1e-3, atol=1e-3)
    np.testing.assert_allclose(np.asarray(feat_hat), np.asarray(ref_hat),
                               rtol=1e-3, atol=1e-3)
    np.testing.assert_allclose(np.asarray(feat_re), np.asarray(ref_re),
                               rtol=1e-3, atol=1e-3)

    print("KERNEL_OK")
</pallas_src>

<mosaic_0001>
module attributes {stable_mosaic.version = 11 : i64} {
  func.func @_src_side_kernel(%arg0: memref<48x32xbf16, #tpu.memory_space<vmem>>, %arg1: memref<32x32xbf16, #tpu.memory_space<vmem>>, %arg2: memref<1x32xf32, #tpu.memory_space<vmem>>, %arg3: memref<32x16xbf16, #tpu.memory_space<vmem>>, %arg4: memref<1x16xf32, #tpu.memory_space<vmem>>, %arg5: memref<16x32xbf16, #tpu.memory_space<vmem>>, %arg6: memref<1x32xf32, #tpu.memory_space<vmem>>, %arg7: memref<32x32xbf16, #tpu.memory_space<vmem>>, %arg8: memref<1x32xf32, #tpu.memory_space<vmem>>, %arg9: memref<48x32xbf16, #tpu.memory_space<vmem>>, %arg10: memref<32x32xbf16, #tpu.memory_space<vmem>>, %arg11: memref<48x16xf32, #tpu.memory_space<vmem>>, %arg12: memref<48x32xf32, #tpu.memory_space<vmem>>, %arg13: memref<48x32xf32, #tpu.memory_space<vmem>>) attributes {dimension_semantics = [], scalar_prefetch = 0 : i64, scratch_operands = 0 : i64, tpu.core_type = #tpu.core_type<tc>} {
    %c0 = arith.constant 0 : index
    %c0_0 = arith.constant 0 : index
    %0 = vector.load %arg0[%c0, %c0_0] : memref<48x32xbf16, #tpu.memory_space<vmem>>, vector<48x32xbf16>
    %c0_1 = arith.constant 0 : index
    %c0_2 = arith.constant 0 : index
    %1 = vector.load %arg1[%c0_1, %c0_2] : memref<32x32xbf16, #tpu.memory_space<vmem>>, vector<32x32xbf16>
    %cst = arith.constant dense<0.000000e+00> : vector<48x32xf32>
    %2 = tpu.matmul %0, %1, %cst {dimension_numbers = #tpu.dot_dimension_numbers<[1], [0], [0], [1], [0, 0, 1, 1], [], []>} : vector<48x32xbf16>, vector<32x32xbf16>, vector<48x32xf32> -> vector<48x32xf32>
    %c0_3 = arith.constant 0 : index
    %c0_4 = arith.constant 0 : index
    %3 = vector.load %arg2[%c0_3, %c0_4] : memref<1x32xf32, #tpu.memory_space<vmem>>, vector<1x32xf32>
    %4 = vector.broadcast %3 : vector<1x32xf32> to vector<48x32xf32>
    %5 = arith.addf %2, %4 : vector<48x32xf32>
    %cst_5 = arith.constant 0.000000e+00 : f32
    %6 = vector.broadcast %cst_5 : f32 to vector<48x32xf32>
    %7 = arith.maximumf %5, %6 : vector<48x32xf32>
    %c0_6 = arith.constant 0 : index
    %c0_7 = arith.constant 0 : index
    %8 = vector.load %arg3[%c0_6, %c0_7] : memref<32x16xbf16, #tpu.memory_space<vmem>>, vector<32x16xbf16>
    %9 = arith.truncf %7 : vector<48x32xf32> to vector<48x32xbf16>
    %cst_8 = arith.constant dense<0.000000e+00> : vector<48x16xf32>
    %10 = tpu.matmul %9, %8, %cst_8 {dimension_numbers = #tpu.dot_dimension_numbers<[1], [0], [0], [1], [0, 0, 1, 1], [], []>} : vector<48x32xbf16>, vector<32x16xbf16>, vector<48x16xf32> -> vector<48x16xf32>
    %c0_9 = arith.constant 0 : index
    %c0_10 = arith.constant 0 : index
    %11 = vector.load %arg4[%c0_9, %c0_10] : memref<1x16xf32, #tpu.memory_space<vmem>>, vector<1x16xf32>
    %12 = vector.broadcast %11 : vector<1x16xf32> to vector<48x16xf32>
    %13 = arith.addf %10, %12 : vector<48x16xf32>
    %c0_11 = arith.constant 0 : index
    %c0_12 = arith.constant 0 : index
    %14 = vector.load %arg11[%c0_11, %c0_12] : memref<48x16xf32, #tpu.memory_space<vmem>>, vector<48x16xf32>
    tpu.vector_store %arg11[%c0_11, %c0_12], %13 {strides = array<i32>} : memref<48x16xf32, #tpu.memory_space<vmem>>, vector<48x16xf32>,
    %c0_13 = arith.constant 0 : index
    %c0_14 = arith.constant 0 : index
    %15 = vector.load %arg5[%c0_13, %c0_14] : memref<16x32xbf16, #tpu.memory_space<vmem>>, vector<16x32xbf16>
    %16 = arith.truncf %13 : vector<48x16xf32> to vector<48x16xbf16>
    %cst_15 = arith.constant dense<0.000000e+00> : vector<48x32xf32>
    %17 = tpu.matmul %16, %15, %cst_15 {dimension_numbers = #tpu.dot_dimension_numbers<[1], [0], [0], [1], [0, 0, 1, 1], [], []>} : vector<48x16xbf16>, vector<16x32xbf16>, vector<48x32xf32> -> vector<48x32xf32>
    %c0_16 = arith.constant 0 : index
    %c0_17 = arith.constant 0 : index
    %18 = vector.load %arg6[%c0_16, %c0_17] : memref<1x32xf32, #tpu.memory_space<vmem>>, vector<1x32xf32>
    %19 = vector.broadcast %18 : vector<1x32xf32> to vector<48x32xf32>
    %20 = arith.addf %17, %19 : vector<48x32xf32>
    %cst_18 = arith.constant 0.000000e+00 : f32
    %21 = vector.broadcast %cst_18 : f32 to vector<48x32xf32>
    %22 = arith.maximumf %20, %21 : vector<48x32xf32>
    %c0_19 = arith.constant 0 : index
    %c0_20 = arith.constant 0 : index
    %23 = vector.load %arg7[%c0_19, %c0_20] : memref<32x32xbf16, #tpu.memory_space<vmem>>, vector<32x32xbf16>
    %24 = arith.truncf %22 : vector<48x32xf32> to vector<48x32xbf16>
    %cst_21 = arith.constant dense<0.000000e+00> : vector<48x32xf32>
    %25 = tpu.matmul %24, %23, %cst_21 {dimension_numbers = #tpu.dot_dimension_numbers<[1], [0], [0], [1], [0, 0, 1, 1], [], []>} : vector<48x32xbf16>, vector<32x32xbf16>, vector<48x32xf32> -> vector<48x32xf32>
    %c0_22 = arith.constant 0 : index
    %c0_23 = arith.constant 0 : index
    %26 = vector.load %arg8[%c0_22, %c0_23] : memref<1x32xf32, #tpu.memory_space<vmem>>, vector<1x32xf32>
    %27 = vector.broadcast %26 : vector<1x32xf32> to vector<48x32xf32>
    %28 = arith.addf %25, %27 : vector<48x32xf32>
    %c0_24 = arith.constant 0 : index
    %c0_25 = arith.constant 0 : index
    %29 = vector.load %arg12[%c0_24, %c0_25] : memref<48x32xf32, #tpu.memory_space<vmem>>, vector<48x32xf32>
    tpu.vector_store %arg12[%c0_24, %c0_25], %28 {strides = array<i32>} : memref<48x32xf32, #tpu.memory_space<vmem>>, vector<48x32xf32>,
    %c0_26 = arith.constant 0 : index
    %c0_27 = arith.constant 0 : index
    %30 = vector.load %arg9[%c0_26, %c0_27] : memref<48x32xbf16, #tpu.memory_space<vmem>>, vector<48x32xbf16>
    %c0_28 = arith.constant 0 : index
    %c0_29 = arith.constant 0 : index
    %31 = vector.load %arg10[%c0_28, %c0_29] : memref<32x32xbf16, #tpu.memory_space<vmem>>, vector<32x32xbf16>
    %cst_30 = arith.constant dense<0.000000e+00> : vector<48x32xf32>
    %32 = tpu.matmul %30, %31, %cst_30 {dimension_numbers = #tpu.dot_dimension_numbers<[1], [0], [0], [1], [0, 0, 1, 1], [], []>} : vector<48x32xbf16>, vector<32x32xbf16>, vector<48x32xf32> -> vector<48x32xf32>
    %c0_31 = arith.constant 0 : index
    %c0_32 = arith.constant 0 : index
    %33 = vector.load %arg13[%c0_31, %c0_32] : memref<48x32xf32, #tpu.memory_space<vmem>>, vector<48x32xf32>
    tpu.vector_store %arg13[%c0_31, %c0_32], %32 {strides = array<i32>} : memref<48x32xf32, #tpu.memory_space<vmem>>, vector<48x32xf32>,
    return
  }
}

</mosaic_0001>

<llo_original>
// kernel: tpu_custom_call.1
$region0: #{tpu_custom_call.1}
  #allocation0 [shape = 'u32[]', space=smem, size = 0x4, offset = 0x4, fixed_abs, tag = 'smem constant byte address 0x4 - core index']
  #allocation1 [shape = 'u32[144,128]{1,0:T(1,128)}', space=vmem, size = 0x12000, scoped, tag = 'internal scratch']
  %s0 = inlined_call_operand.vmem [shape: bf16[48,32], index: 0, kind: input, shape index: {}]
  %s1 = inlined_call_operand.vmem [shape: bf16[32,32], index: 1, kind: input, shape index: {}]
  %s2 = inlined_call_operand.vmem [shape: f32[1,32], index: 2, kind: input, shape index: {}]
  %s3 = inlined_call_operand.vmem [shape: bf16[32,16], index: 3, kind: input, shape index: {}]
  %s4 = inlined_call_operand.vmem [shape: f32[1,16], index: 4, kind: input, shape index: {}]
  %s5 = inlined_call_operand.vmem [shape: bf16[16,32], index: 5, kind: input, shape index: {}]
  %s6 = inlined_call_operand.vmem [shape: f32[1,32], index: 6, kind: input, shape index: {}]
  %s7 = inlined_call_operand.vmem [shape: bf16[32,32], index: 7, kind: input, shape index: {}]
  %s8 = inlined_call_operand.vmem [shape: f32[1,32], index: 8, kind: input, shape index: {}]
  %s9 = inlined_call_operand.vmem [shape: bf16[48,32], index: 9, kind: input, shape index: {}]
  %s10 = inlined_call_operand.vmem [shape: bf16[32,32], index: 10, kind: input, shape index: {}]
  %s11 = inlined_call_operand.vmem [shape: f32[48,16], index: 11, kind: output, shape index: {0}]
  %s12 = inlined_call_operand.vmem [shape: f32[48,32], index: 12, kind: output, shape index: {1}]
  %s13 = inlined_call_operand.vmem [shape: f32[48,32], index: 13, kind: output, shape index: {2}]
  %14 = xla_tuple %s11, %s12, %s13
  %s15 = sld [smem:[#allocation0]]
  $region70: #{tpu_custom_call.1} parent=0
    _
  %s17 = ssub.s32 1, %s15
  %s18 = scalar_select 0, %s17, %s15
  // Predicated region
  $region2: #{tpu_custom_call.1} parent=0 // pred_check
    _
  $region3: #{tpu_custom_call.1} parent=0 // pred_check_branch
    %20 = sbr.rel (0) target = $region5
  $region4: #{tpu_custom_call.1} parent=0 // pred_region
    _
  $region5: #{tpu_custom_call.1} parent=0 // pred_fallthru
    _
  // Predicated region
  $region6: #{tpu_custom_call.1} parent=0 // pred_check
    _
  $region7: #{tpu_custom_call.1} parent=0 // pred_check_branch
    %22 = sbr.rel (0) target = $region9
  $region8: #{tpu_custom_call.1} parent=0 // pred_region
    _
  $region9: #{tpu_custom_call.1} parent=0 // pred_fallthru
    _
  // Predicated region
  $region10: #{tpu_custom_call.1} parent=0 // pred_check
    _
  $region11: #{tpu_custom_call.1} parent=0 // pred_check_branch
    %24 = sbr.rel (0) target = $region13
  $region12: #{tpu_custom_call.1} parent=0 // pred_region
    _
  $region13: #{tpu_custom_call.1} parent=0 // pred_fallthru
    _
  // Predicated region
  $region14: #{tpu_custom_call.1} parent=0 // pred_check
    _
  $region15: #{tpu_custom_call.1} parent=0 // pred_check_branch
    %26 = sbr.rel (0) target = $region17
  $region16: #{tpu_custom_call.1} parent=0 // pred_region
    _
  $region17: #{tpu_custom_call.1} parent=0 // pred_fallthru
    _
  // Predicated region
  $region18: #{tpu_custom_call.1} parent=0 // pred_check
    _
  $region19: #{tpu_custom_call.1} parent=0 // pred_check_branch
    %28 = sbr.rel (0) target = $region21
  $region20: #{tpu_custom_call.1} parent=0 // pred_region
    _
  $region21: #{tpu_custom_call.1} parent=0 // pred_fallthru
    _
  // Predicated region
  $region22: #{tpu_custom_call.1} parent=0 // pred_check
    _
  $region23: #{tpu_custom_call.1} parent=0 // pred_check_branch
    %30 = sbr.rel (0) target = $region25
  $region24: #{tpu_custom_call.1} parent=0 // pred_region
    _
  $region25: #{tpu_custom_call.1} parent=0 // pred_fallthru
    _
  // Predicated region
  $region26: #{tpu_custom_call.1} parent=0 // pred_check
    _
  $region27: #{tpu_custom_call.1} parent=0 // pred_check_branch
    %32 = sbr.rel (0) target = $region29
  $region28: #{tpu_custom_call.1} parent=0 // pred_region
    _
  $region29: #{tpu_custom_call.1} parent=0 // pred_fallthru
    _
  // Predicated region
  $region30: #{tpu_custom_call.1} parent=0 // pred_check
    _
  $region31: #{tpu_custom_call.1} parent=0 // pred_check_branch
    %34 = sbr.rel (0) target = $region33
  $region32: #{tpu_custom_call.1} parent=0 // pred_region
    _
  $region33: #{tpu_custom_call.1} parent=0 // pred_fallthru
    _
  // Predicated region
  $region34: #{tpu_custom_call.1} parent=0 // pred_check
    _
  $region35: #{tpu_custom_call.1} parent=0 // pred_check_branch
    %36 = sbr.rel (0) target = $region37
  $region36: #{tpu_custom_call.1} parent=0 // pred_region
    _
  $region37: #{tpu_custom_call.1} parent=0 // pred_fallthru
    _
  // Predicated region
  $region38: #{tpu_custom_call.1} parent=0 // pred_check
    _
  $region39: #{tpu_custom_call.1} parent=0 // pred_check_branch
    %38 = sbr.rel (0) target = $region41
  $region40: #{tpu_custom_call.1} parent=0 // pred_region
    _
  $region41: #{tpu_custom_call.1} parent=0 // pred_fallthru
    _
  // Predicated region
  $region42: #{tpu_custom_call.1} parent=0 // pred_check
    _
  $region43: #{tpu_custom_call.1} parent=0 // pred_check_branch
    %40 = sbr.rel (0) target = $region45
  $region44: #{tpu_custom_call.1} parent=0 // pred_region
    _
  $region45: #{tpu_custom_call.1} parent=0 // pred_fallthru
    _
  %v42 = vld [vmem:[%s0] sm:$0xf]
  %v43 = vld [vmem:[%s0 + $0x4] sm:$0xf]
  %v44 = vld [vmem:[%s0 + $0x8] sm:$0xf]
  %v45 = vld [vmem:[%s0 + $0xc] sm:$0xf]
  %v46 = vld [vmem:[%s0 + $0x10] sm:$0xf]
  %v47 = vld [vmem:[%s0 + $0x14] sm:$0xf]
  %v48 = vld [vmem:[%s1] sm:$0xf]
  %v49 = vld [vmem:[%s1 + $0x4] sm:$0xf]
  %v50 = vld [vmem:[%s1 + $0x8] sm:$0xf]
  %v51 = vld [vmem:[%s1 + $0xc] sm:$0xf]
  %v52 = vld [vmem:[%s2] sm:$0x1]
  %v54 = vlaneseq
  %v55 = vshrl.u32 %v54, 7
  %v56 = vsub.s32 0, %v55
  %v57 = vrot.slane %v52, %v56
  %v65 = vunpack.c.l.b16 %v42
  %v66 = vunpack.c.l.b16 %v43
  %v67 = vunpack.c.l.b16 %v44
  %v68 = vunpack.c.l.b16 %v45
  %v69 = vunpack.c.l.b16 %v46
  %v70 = vunpack.c.l.b16 %v47
  %v71 = vpack.c.b16 %v66, %v65
  %v72 = vpack.c.b16 %v68, %v67
  %v73 = vpack.c.b16 %v70, %v69
  %v78 = vunpack.c.l.b16 %v48
  %v79 = vunpack.c.l.b16 %v49
  %v80 = vunpack.c.l.b16 %v50
  %v81 = vunpack.c.l.b16 %v51
  %v82 = vpack.c.b16 %v79, %v78
  %v83 = vpack.c.b16 %v81, %v80
  %vm86 = vcmask 261120
  %v88 = vsel %vm86, %v71, 0
  %v91 = vsel %vm86, %v72, 0
  %v94 = vsel %vm86, %v73, 0
  %96 = vmatprep.subr.bf16.mxu0 0
  %97 = vmatpush1.bf16.msra.mxu0 %v82
  %98 = vmatprep.subr.bf16.mxu0 0
  %99 = vmatpush1.bf16.msra.mxu0 %v83
  %100 = vmatprep.subr.bf16.mxu0 0
  %101 = vmatpush1.bf16.msra.mxu0 0
  %102 = vmatprep.subr.bf16.mxu0 0
  %103 = vmatpush1.bf16.msra.mxu0 0
  %104 = vmatprep.subr.bf16.mxu0 0
  %105 = vmatpush1.bf16.msra.mxu0 0
  %106 = vmatprep.subr.bf16.mxu0 0
  %107 = vmatpush1.bf16.msra.mxu0 0
  %108 = vmatprep.subr.bf16.mxu0 0
  %109 = vmatpush1.bf16.msra.mxu0 0
  %110 = vmatprep.subr.bf16.mxu0 0
  %111 = vmatpush1.bf16.msra.mxu0 0
  %112 = vmatprep.subr.bf16.mxu0 0
  %113 = vmatpush1.bf16.msra.mxu0 0
  %114 = vmatprep.subr.bf16.mxu0 0
  %115 = vmatpush1.bf16.msra.mxu0 0
  %116 = vmatprep.subr.bf16.mxu0 0
  %117 = vmatpush1.bf16.msra.mxu0 0
  %118 = vmatprep.subr.bf16.mxu0 0
  %119 = vmatpush1.bf16.msra.mxu0 0
  %120 = vmatprep.subr.bf16.mxu0 0
  %121 = vmatpush1.bf16.msra.mxu0 0
  %122 = vmatprep.subr.bf16.mxu0 0
  %123 = vmatpush1.bf16.msra.mxu0 0
  %124 = vmatprep.subr.bf16.mxu0 0
  %125 = vmatpush1.bf16.msra.mxu0 0
  %126 = vmatprep.subr.bf16.mxu0 0
  %127 = vmatpush1.bf16.msra.mxu0 0
  %128 = vmatprep.mubr.bf16.mxu0 0
  %129 = vmatmul.mubr.bf16.gmra.mrb[0].mxu0 %v88
  %v130 = vpop.f32.mrb[0].mxu0
  %v131 = vadd.f32 %v57, %v130
  %v132 = vpop.f32.mrb[0].mxu0
  %v133 = vpop.f32.mrb[0].mxu0
  %v134 = vadd.f32 %v57, %v133
  %v135 = vpop.f32.mrb[0].mxu0
  %136 = vmatprep.mubr.bf16.mxu0 0
  %137 = vmatmul.mubr.bf16.gmra.mrb[0].mxu0 %v91
  %v138 = vpop.f32.mrb[0].mxu0
  %v139 = vadd.f32 %v57, %v138
  %v140 = vpop.f32.mrb[0].mxu0
  %v141 = vpop.f32.mrb[0].mxu0
  %v142 = vadd.f32 %v57, %v141
  %v143 = vpop.f32.mrb[0].mxu0
  %144 = vmatprep.mubr.bf16.mxu0 0
  %145 = vmatmul.mubr.bf16.gmra.mrb[0].mxu0 %v94
  %v146 = vpop.f32.mrb[0].mxu0
  %v147 = vadd.f32 %v57, %v146
  %v148 = vpop.f32.mrb[0].mxu0
  %v149 = vpop.f32.mrb[0].mxu0
  %v150 = vadd.f32 %v57, %v149
  %v151 = vpop.f32.mrb[0].mxu0
  %152 = vdwg.mxu0
  %v153 = vmax.f32 %v131, 0.0
  %v154 = vmax.f32 %v134, 0.0
  %v155 = vmax.f32 %v139, 0.0
  %v156 = vmax.f32 %v142, 0.0
  %v157 = vmax.f32 %v147, 0.0
  %v158 = vmax.f32 %v150, 0.0
  %v159 = vld [vmem:[%s3] sm:$0xf]
  %v160 = vld [vmem:[%s3 + $0x4] sm:$0xf]
  %v161 = vld [vmem:[%s3 + $0x8] sm:$0xf]
  %v162 = vld [vmem:[%s3 + $0xc] sm:$0xf]
  %v163 = vpack.c.bf16 %v154, %v153
  %v164 = vpack.c.bf16 %v156, %v155
  %v165 = vpack.c.bf16 %v158, %v157
  %v166 = vld [vmem:[%s4] sm:$0x1]
  %v168 = vlaneseq
  %v169 = vshrl.u32 %v168, 7
  %v170 = vsub.s32 0, %v169
  %v171 = vrot.slane %v166, %v170
  %v177 = vunpack.c.l.b16 %v159
  %v178 = vunpack.c.l.b16 %v160
  %v179 = vunpack.c.l.b16 %v161
  %v180 = vunpack.c.l.b16 %v162
  %v181 = vpack.c.b16 %v178, %v177
  %v182 = vpack.c.b16 %v180, %v179
  %v186 = vsel %vm86, %v163, 0
  %v189 = vsel %vm86, %v164, 0
  %v192 = vsel %vm86, %v165, 0
  %194 = vmatprep.subr.bf16.mxu0 0
  %195 = vmatpush1.bf16.msra.mxu0 %v181
  %196 = vmatprep.subr.bf16.mxu0 0
  %197 = vmatpush1.bf16.msra.mxu0 %v182
  %198 = vmatprep.subr.bf16.mxu0 0
  %199 = vmatpush1.bf16.msra.mxu0 0
  %200 = vmatprep.subr.bf16.mxu0 0
  %201 = vmatpush1.bf16.msra.mxu0 0
  %202 = vmatprep.subr.bf16.mxu0 0
  %203 = vmatpush1.bf16.msra.mxu0 0
  %204 = vmatprep.subr.bf16.mxu0 0
  %205 = vmatpush1.bf16.msra.mxu0 0
  %206 = vmatprep.subr.bf16.mxu0 0
  %207 = vmatpush1.bf16.msra.mxu0 0
  %208 = vmatprep.subr.bf16.mxu0 0
  %209 = vmatpush1.bf16.msra.mxu0 0
  %210 = vmatprep.subr.bf16.mxu0 0
  %211 = vmatpush1.bf16.msra.mxu0 0
  %212 = vmatprep.subr.bf16.mxu0 0
  %213 = vmatpush1.bf16.msra.mxu0 0
  %214 = vmatprep.subr.bf16.mxu0 0
  %215 = vmatpush1.bf16.msra.mxu0 0
  %216 = vmatprep.subr.bf16.mxu0 0
  %217 = vmatpush1.bf16.msra.mxu0 0
  %218 = vmatprep.subr.bf16.mxu0 0
  %219 = vmatpush1.bf16.msra.mxu0 0
  %220 = vmatprep.subr.bf16.mxu0 0
  %221 = vmatpush1.bf16.msra.mxu0 0
  %222 = vmatprep.subr.bf16.mxu0 0
  %223 = vmatpush1.bf16.msra.mxu0 0
  %224 = vmatprep.subr.bf16.mxu0 0
  %225 = vmatpush1.bf16.msra.mxu0 0
  %226 = vmatprep.mubr.bf16.mxu0 0
  %227 = vmatmul.mubr.bf16.gmra.mrb[0].mxu0 %v186
  %v228 = vpop.f32.mrb[0].mxu0
  %v229 = vadd.f32 %v171, %v228
  %v230 = vpop.f32.mrb[0].mxu0
  %v231 = vpop.f32.mrb[0].mxu0
  %v232 = vadd.f32 %v171, %v231
  %v233 = vpop.f32.mrb[0].mxu0
  %234 = vmatprep.mubr.bf16.mxu0 0
  %235 = vmatmul.mubr.bf16.gmra.mrb[0].mxu0 %v189
  %v236 = vpop.f32.mrb[0].mxu0
  %v237 = vadd.f32 %v171, %v236
  %v238 = vpop.f32.mrb[0].mxu0
  %v239 = vpop.f32.mrb[0].mxu0
  %v240 = vadd.f32 %v171, %v239
  %v241 = vpop.f32.mrb[0].mxu0
  %242 = vmatprep.mubr.bf16.mxu0 0
  %243 = vmatmul.mubr.bf16.gmra.mrb[0].mxu0 %v192
  %v244 = vpop.f32.mrb[0].mxu0
  %v245 = vadd.f32 %v171, %v244
  %v246 = vpop.f32.mrb[0].mxu0
  %v247 = vpop.f32.mrb[0].mxu0
  %v248 = vadd.f32 %v171, %v247
  %v249 = vpop.f32.mrb[0].mxu0
  %250 = vdwg.mxu0
  %vm251 = vcmask 130048
  %252 = vst.msk [vmem:[%s11] sm:$0xff] %vm251, %v229
  %253 = vst.msk [vmem:[%s11 + $0x8] sm:$0xff] %vm251, %v232
  %254 = vst.msk [vmem:[%s11 + $0x10] sm:$0xff] %vm251, %v237
  %255 = vst.msk [vmem:[%s11 + $0x18] sm:$0xff] %vm251, %v240
  %256 = vst.msk [vmem:[%s11 + $0x20] sm:$0xff] %vm251, %v245
  %257 = vst.msk [vmem:[%s11 + $0x28] sm:$0xff] %vm251, %v248
  %v258 = vld [vmem:[%s5] sm:$0xf]
  %v259 = vld [vmem:[%s5 + $0x4] sm:$0xf]
  %v260 = vpack.c.bf16 %v232, %v229
  %v261 = vpack.c.bf16 %v240, %v237
  %v262 = vpack.c.bf16 %v248, %v245
  %v263 = vld [vmem:[%s6] sm:$0x1]
  %v265 = vlaneseq
  %v266 = vshrl.u32 %v265, 7
  %v267 = vsub.s32 0, %v266
  %v268 = vrot.slane %v263, %v267
  %v272 = vunpack.c.l.b16 %v258
  %v273 = vunpack.c.l.b16 %v259
  %v274 = vpack.c.b16 %v273, %v272
  %v277 = vsel %vm251, %v260, 0
  %v280 = vsel %vm251, %v261, 0
  %v283 = vsel %vm251, %v262, 0
  %285 = vmatprep.subr.bf16.mxu0 0
  %286 = vmatpush1.bf16.msra.mxu0 %v274
  %287 = vmatprep.subr.bf16.mxu0 0
  %288 = vmatpush1.bf16.msra.mxu0 0
  %289 = vmatprep.subr.bf16.mxu0 0
  %290 = vmatpush1.bf16.msra.mxu0 0
  %291 = vmatprep.subr.bf16.mxu0 0
  %292 = vmatpush1.bf16.msra.mxu0 0
  %293 = vmatprep.subr.bf16.mxu0 0
  %294 = vmatpush1.bf16.msra.mxu0 0
  %295 = vmatprep.subr.bf16.mxu0 0
  %296 = vmatpush1.bf16.msra.mxu0 0
  %297 = vmatprep.subr.bf16.mxu0 0
  %298 = vmatpush1.bf16.msra.mxu0 0
  %299 = vmatprep.subr.bf16.mxu0 0
  %300 = vmatpush1.bf16.msra.mxu0 0
  %301 = vmatprep.subr.bf16.mxu0 0
  %302 = vmatpush1.bf16.msra.mxu0 0
  %303 = vmatprep.subr.bf16.mxu0 0
  %304 = vmatpush1.bf16.msra.mxu0 0
  %305 = vmatprep.subr.bf16.mxu0 0
  %306 = vmatpush1.bf16.msra.mxu0 0
  %307 = vmatprep.subr.bf16.mxu0 0
  %308 = vmatpush1.bf16.msra.mxu0 0
  %309 = vmatprep.subr.bf16.mxu0 0
  %310 = vmatpush1.bf16.msra.mxu0 0
  %311 = vmatprep.subr.bf16.mxu0 0
  %312 = vmatpush1.bf16.msra.mxu0 0
  %313 = vmatprep.subr.bf16.mxu0 0
  %314 = vmatpush1.bf16.msra.mxu0 0
  %315 = vmatprep.subr.bf16.mxu0 0
  %316 = vmatpush1.bf16.msra.mxu0 0
  %317 = vmatprep.mubr.bf16.mxu0 0
  %318 = vmatmul.mubr.bf16.gmra.mrb[0].mxu0 %v277
  %v319 = vpop.f32.mrb[0].mxu0
  %v320 = vadd.f32 %v268, %v319
  %v321 = vpop.f32.mrb[0].mxu0
  %v322 = vpop.f32.mrb[0].mxu0
  %v323 = vadd.f32 %v268, %v322
  %v324 = vpop.f32.mrb[0].mxu0
  %325 = vmatprep.mubr.bf16.mxu0 0
  %326 = vmatmul.mubr.bf16.gmra.mrb[0].mxu0 %v280
  %v327 = vpop.f32.mrb[0].mxu0
  %v328 = vadd.f32 %v268, %v327
  %v329 = vpop.f32.mrb[0].mxu0
  %v330 = vpop.f32.mrb[0].mxu0
  %v331 = vadd.f32 %v268, %v330
  %v332 = vpop.f32.mrb[0].mxu0
  %333 = vmatprep.mubr.bf16.mxu0 0
  %334 = vmatmul.mubr.bf16.gmra.mrb[0].mxu0 %v283
  %v335 = vpop.f32.mrb[0].mxu0
  %v336 = vadd.f32 %v268, %v335
  %v337 = vpop.f32.mrb[0].mxu0
  %v338 = vpop.f32.mrb[0].mxu0
  %v339 = vadd.f32 %v268, %v338
  %v340 = vpop.f32.mrb[0].mxu0
  %341 = vdwg.mxu0
  %v342 = vmax.f32 %v320, 0.0
  %v343 = vmax.f32 %v323, 0.0
  %v344 = vmax.f32 %v328, 0.0
  %v345 = vmax.f32 %v331, 0.0
  %v346 = vmax.f32 %v336, 0.0
  %v347 = vmax.f32 %v339, 0.0
  %v348 = vld [vmem:[%s7] sm:$0xf]
  %v349 = vld [vmem:[%s7 + $0x4] sm:$0xf]
  %v350 = vld [vmem:[%s7 + $0x8] sm:$0xf]
  %v351 = vld [vmem:[%s7 + $0xc] sm:$0xf]
  %v352 = vpack.c.bf16 %v343, %v342
  %v353 = vpack.c.bf16 %v345, %v344
  %v354 = vpack.c.bf16 %v347, %v346
  %v355 = vld [vmem:[%s8] sm:$0x1]
  %v357 = vlaneseq
  %v358 = vshrl.u32 %v357, 7
  %v359 = vsub.s32 0, %v358
  %v360 = vrot.slane %v355, %v359
  %v366 = vunpack.c.l.b16 %v348
  %v367 = vunpack.c.l.b16 %v349
  %v368 = vunpack.c.l.b16 %v350
  %v369 = vunpack.c.l.b16 %v351
  %v370 = vpack.c.b16 %v367, %v366
  %v371 = vpack.c.b16 %v369, %v368
  %v375 = vsel %vm86, %v352, 0
  %v378 = vsel %vm86, %v353, 0
  %v381 = vsel %vm86, %v354, 0
  %383 = vmatprep.subr.bf16.mxu0 0
  %384 = vmatpush1.bf16.msra.mxu0 %v370
  %385 = vmatprep.subr.bf16.mxu0 0
  %386 = vmatpush1.bf16.msra.mxu0 %v371
  %387 = vmatprep.subr.bf16.mxu0 0
  %388 = vmatpush1.bf16.msra.mxu0 0
  %389 = vmatprep.subr.bf16.mxu0 0
  %390 = vmatpush1.bf16.msra.mxu0 0
  %391 = vmatprep.subr.bf16.mxu0 0
  %392 = vmatpush1.bf16.msra.mxu0 0
  %393 = vmatprep.subr.bf16.mxu0 0
  %394 = vmatpush1.bf16.msra.mxu0 0
  %395 = vmatprep.subr.bf16.mxu0 0
  %396 = vmatpush1.bf16.msra.mxu0 0
  %397 = vmatprep.subr.bf16.mxu0 0
  %398 = vmatpush1.bf16.msra.mxu0 0
  %399 = vmatprep.subr.bf16.mxu0 0
  %400 = vmatpush1.bf16.msra.mxu0 0
  %401 = vmatprep.subr.bf16.mxu0 0
  %402 = vmatpush1.bf16.msra.mxu0 0
  %403 = vmatprep.subr.bf16.mxu0 0
  %404 = vmatpush1.bf16.msra.mxu0 0
  %405 = vmatprep.subr.bf16.mxu0 0
  %406 = vmatpush1.bf16.msra.mxu0 0
  %407 = vmatprep.subr.bf16.mxu0 0
  %408 = vmatpush1.bf16.msra.mxu0 0
  %409 = vmatprep.subr.bf16.mxu0 0
  %410 = vmatpush1.bf16.msra.mxu0 0
  %411 = vmatprep.subr.bf16.mxu0 0
  %412 = vmatpush1.bf16.msra.mxu0 0
  %413 = vmatprep.subr.bf16.mxu0 0
  %414 = vmatpush1.bf16.msra.mxu0 0
  %415 = vmatprep.mubr.bf16.mxu0 0
  %416 = vmatmul.mubr.bf16.gmra.mrb[0].mxu0 %v375
  %v417 = vpop.f32.mrb[0].mxu0
  %v418 = vadd.f32 %v360, %v417
  %v419 = vpop.f32.mrb[0].mxu0
  %v420 = vpop.f32.mrb[0].mxu0
  %v421 = vadd.f32 %v360, %v420
  %v422 = vpop.f32.mrb[0].mxu0
  %423 = vmatprep.mubr.bf16.mxu0 0
  %424 = vmatmul.mubr.bf16.gmra.mrb[0].mxu0 %v378
  %v425 = vpop.f32.mrb[0].mxu0
  %v426 = vadd.f32 %v360, %v425
  %v427 = vpop.f32.mrb[0].mxu0
  %v428 = vpop.f32.mrb[0].mxu0
  %v429 = vadd.f32 %v360, %v428
  %v430 = vpop.f32.mrb[0].mxu0
  %431 = vmatprep.mubr.bf16.mxu0 0
  %432 = vmatmul.mubr.bf16.gmra.mrb[0].mxu0 %v381
  %v433 = vpop.f32.mrb[0].mxu0
  %v434 = vadd.f32 %v360, %v433
  %v435 = vpop.f32.mrb[0].mxu0
  %v436 = vpop.f32.mrb[0].mxu0
  %v437 = vadd.f32 %v360, %v436
  %v438 = vpop.f32.mrb[0].mxu0
  %439 = vdwg.mxu0
  %440 = vst.msk [vmem:[%s12] sm:$0xff] %vm86, %v418
  %441 = vst.msk [vmem:[%s12 + $0x8] sm:$0xff] %vm86, %v421
  %442 = vst.msk [vmem:[%s12 + $0x10] sm:$0xff] %vm86, %v426
  %443 = vst.msk [vmem:[%s12 + $0x18] sm:$0xff] %vm86, %v429
  %444 = vst.msk [vmem:[%s12 + $0x20] sm:$0xff] %vm86, %v434
  %445 = vst.msk [vmem:[%s12 + $0x28] sm:$0xff] %vm86, %v437
  %v446 = vld [vmem:[%s9] sm:$0xf]
  %v447 = vld [vmem:[%s9 + $0x4] sm:$0xf]
  %v448 = vld [vmem:[%s9 + $0x8] sm:$0xf]
  %v449 = vld [vmem:[%s9 + $0xc] sm:$0xf]
  %v450 = vld [vmem:[%s9 + $0x10] sm:$0xf]
  %v451 = vld [vmem:[%s9 + $0x14] sm:$0xf]
  %v452 = vld [vmem:[%s10] sm:$0xf]
  %v453 = vld [vmem:[%s10 + $0x4] sm:$0xf]
  %v454 = vld [vmem:[%s10 + $0x8] sm:$0xf]
  %v455 = vld [vmem:[%s10 + $0xc] sm:$0xf]
  %v462 = vunpack.c.l.b16 %v446
  %v463 = vunpack.c.l.b16 %v447
  %v464 = vunpack.c.l.b16 %v448
  %v465 = vunpack.c.l.b16 %v449
  %v466 = vunpack.c.l.b16 %v450
  %v467 = vunpack.c.l.b16 %v451
  %v468 = vpack.c.b16 %v463, %v462
  %v469 = vpack.c.b16 %v465, %v464
  %v470 = vpack.c.b16 %v467, %v466
  %v475 = vunpack.c.l.b16 %v452
  %v476 = vunpack.c.l.b16 %v453
  %v477 = vunpack.c.l.b16 %v454
  %v478 = vunpack.c.l.b16 %v455
  %v479 = vpack.c.b16 %v476, %v475
  %v480 = vpack.c.b16 %v478, %v477
  %v484 = vsel %vm86, %v468, 0
  %v487 = vsel %vm86, %v469, 0
  %v490 = vsel %vm86, %v470, 0
  %492 = vmatprep.subr.bf16.mxu0 0
  %493 = vmatpush1.bf16.msra.mxu0 %v479
  %494 = vmatprep.subr.bf16.mxu0 0
  %495 = vmatpush1.bf16.msra.mxu0 %v480
  %496 = vmatprep.subr.bf16.mxu0 0
  %497 = vmatpush1.bf16.msra.mxu0 0
  %498 = vmatprep.subr.bf16.mxu0 0
  %499 = vmatpush1.bf16.msra.mxu0 0
  %500 = vmatprep.subr.bf16.mxu0 0
  %501 = vmatpush1.bf16.msra.mxu0 0
  %502 = vmatprep.subr.bf16.mxu0 0
  %503 = vmatpush1.bf16.msra.mxu0 0
  %504 = vmatprep.subr.bf16.mxu0 0
  %505 = vmatpush1.bf16.msra.mxu0 0
  %506 = vmatprep.subr.bf16.mxu0 0
  %507 = vmatpush1.bf16.msra.mxu0 0
  %508 = vmatprep.subr.bf16.mxu0 0
  %509 = vmatpush1.bf16.msra.mxu0 0
  %510 = vmatprep.subr.bf16.mxu0 0
  %511 = vmatpush1.bf16.msra.mxu0 0
  %512 = vmatprep.subr.bf16.mxu0 0
  %513 = vmatpush1.bf16.msra.mxu0 0
  %514 = vmatprep.subr.bf16.mxu0 0
  %515 = vmatpush1.bf16.msra.mxu0 0
  %516 = vmatprep.subr.bf16.mxu0 0
  %517 = vmatpush1.bf16.msra.mxu0 0
  %518 = vmatprep.subr.bf16.mxu0 0
  %519 = vmatpush1.bf16.msra.mxu0 0
  %520 = vmatprep.subr.bf16.mxu0 0
  %521 = vmatpush1.bf16.msra.mxu0 0
  %522 = vmatprep.subr.bf16.mxu0 0
  %523 = vmatpush1.bf16.msra.mxu0 0
  %524 = vmatprep.mubr.bf16.mxu0 0
  %525 = vmatmul.mubr.bf16.gmra.mrb[0].mxu0 %v484
  %v526 = vpop.f32.mrb[0].mxu0
  %v527 = vadd.f32 0.0, %v526
  %v528 = vpop.f32.mrb[0].mxu0
  %v529 = vpop.f32.mrb[0].mxu0
  %v530 = vadd.f32 0.0, %v529
  %v531 = vpop.f32.mrb[0].mxu0
  %532 = vmatprep.mubr.bf16.mxu0 0
  %533 = vmatmul.mubr.bf16.gmra.mrb[0].mxu0 %v487
  %v534 = vpop.f32.mrb[0].mxu0
  %v535 = vadd.f32 0.0, %v534
  %v536 = vpop.f32.mrb[0].mxu0
  %v537 = vpop.f32.mrb[0].mxu0
  %v538 = vadd.f32 0.0, %v537
  %v539 = vpop.f32.mrb[0].mxu0
  %540 = vmatprep.mubr.bf16.mxu0 0
  %541 = vmatmul.mubr.bf16.gmra.mrb[0].mxu0 %v490
  %v542 = vpop.f32.mrb[0].mxu0
  %v543 = vadd.f32 0.0, %v542
  %v544 = vpop.f32.mrb[0].mxu0
  %v545 = vpop.f32.mrb[0].mxu0
  %v546 = vadd.f32 0.0, %v545
  %v547 = vpop.f32.mrb[0].mxu0
  %548 = vdwg.mxu0
  %549 = vst.msk [vmem:[%s13] sm:$0xff] %vm86, %v527
  %550 = vst.msk [vmem:[%s13 + $0x8] sm:$0xff] %vm86, %v530
  %551 = vst.msk [vmem:[%s13 + $0x10] sm:$0xff] %vm86, %v535
  %552 = vst.msk [vmem:[%s13 + $0x18] sm:$0xff] %vm86, %v538
  %553 = vst.msk [vmem:[%s13 + $0x20] sm:$0xff] %vm86, %v543
  %554 = vst.msk [vmem:[%s13 + $0x28] sm:$0xff] %vm86, %v546
  // Predicated region
  $region46: #{tpu_custom_call.1} parent=0 // pred_check
    _
  $region47: #{tpu_custom_call.1} parent=0 // pred_check_branch
    %556 = sbr.rel (0) target = $region49
  $region48: #{tpu_custom_call.1} parent=0 // pred_region
    _
  $region49: #{tpu_custom_call.1} parent=0 // pred_fallthru
    _
  // Predicated region
  $region50: #{tpu_custom_call.1} parent=0 // pred_check
    _
  $region51: #{tpu_custom_call.1} parent=0 // pred_check_branch
    %558 = sbr.rel (0) target = $region53
  $region52: #{tpu_custom_call.1} parent=0 // pred_region
    _
  $region53: #{tpu_custom_call.1} parent=0 // pred_fallthru
    _
  // Predicated region
  $region54: #{tpu_custom_call.1} parent=0 // pred_check
    _
  $region55: #{tpu_custom_call.1} parent=0 // pred_check_branch
    %560 = sbr.rel (0) target = $region57
  $region56: #{tpu_custom_call.1} parent=0 // pred_region
    _
  $region57: #{tpu_custom_call.1} parent=0 // pred_fallthru
    _
  // Predicated region
  $region58: #{tpu_custom_call.1} parent=0 // pred_check
    _
  $region59: #{tpu_custom_call.1} parent=0 // pred_check_branch
    %562 = sbr.rel (0) target = $region61
  $region60: #{tpu_custom_call.1} parent=0 // pred_region
    _
  $region61: #{tpu_custom_call.1} parent=0 // pred_fallthru
    _
  // Predicated region
  $region62: #{tpu_custom_call.1} parent=0 // pred_check
    _
  $region63: #{tpu_custom_call.1} parent=0 // pred_check_branch
    %564 = sbr.rel (0) target = $region65
  $region64: #{tpu_custom_call.1} parent=0 // pred_region
    _
  $region65: #{tpu_custom_call.1} parent=0 // pred_fallthru
    _
  // Predicated region
  $region66: #{tpu_custom_call.1} parent=0 // pred_check
    _
  $region67: #{tpu_custom_call.1} parent=0 // pred_check_branch
    %566 = sbr.rel (0) target = $region69
  $region68: #{tpu_custom_call.1} parent=0 // pred_region
    _
  $region69: #{tpu_custom_call.1} parent=0 // pred_fallthru
    _

</llo_original>
